<compile_context>
chip_gen: v5e
topology: v5e:2x2
jax: 0.10.0
libtpu: 0.0.40
codegen_flags: <defaults>
</compile_context>

<pallas_src>
import math

import jax
import jax.numpy as jnp
from jax.experimental import pallas as pl
from jax.experimental.pallas import tpu as pltpu


# ----------------------------------------------------------------------------
# Pallas kernel: one affine map  o = x @ W + b   (the entire fused forward)
# ----------------------------------------------------------------------------
def _affine_kernel(x_ref, w_ref, b_ref, o_ref):
    xv = x_ref[...].astype(jnp.float32)          # cast in-kernel (no HBM copy)
    acc = jnp.dot(xv, w_ref[...], preferred_element_type=jnp.float32) + b_ref[...]
    o_ref[...] = acc.astype(o_ref.dtype)


# 1 MiB f32 x-tile at width 128.  Double-buffered x + o tiles plus the resident
# (128,128) weight is ~4.2 MiB: within the default scoped VMEM on v5e (16 MiB),
# v6e (32 MiB) and v7x (32 MiB scoped / 64 MiB physical).
_MAX_TM = 2048


def _round_up(x, m):
    return ((x + m - 1) // m) * m


def _pick_block_rows(rows):
    """Largest 8-aligned row tile up to _MAX_TM; single step for small inputs."""
    return min(_MAX_TM, _round_up(max(rows, 1), 8))


def _affine_pallas(x2d, w, b, out_dtype, tm):
    """y = x2d @ w + b as one pallas_call. x2d: (R, K) with R % tm == 0."""
    R, K = x2d.shape
    Kout = w.shape[1]
    assert R % tm == 0, (R, tm)
    return pl.pallas_call(
        _affine_kernel,
        out_shape=jax.ShapeDtypeStruct((R, Kout), out_dtype),
        grid=(R // tm,),
        in_specs=[
            pl.BlockSpec((tm, K), lambda i: (i, 0)),
            pl.BlockSpec((K, Kout), lambda i: (0, 0)),
            pl.BlockSpec((1, Kout), lambda i: (0, 0)),
        ],
        out_specs=pl.BlockSpec((tm, Kout), lambda i: (i, 0)),
        compiler_params=pltpu.CompilerParams(dimension_semantics=("parallel",)),
    )(x2d, w, b.reshape(1, Kout))


# ----------------------------------------------------------------------------
# Parameters (mirrors GroupedXNetFeature.__init__), with build-time folding
# and lane-packing so the forward graph stays minimal.
# ----------------------------------------------------------------------------
def _linear_params(key, in_features, out_features):
    """torch.nn.Linear default init: U(-1/sqrt(in), 1/sqrt(in)) for weight & bias."""
    kw, kb = jax.random.split(key)
    bound = 1.0 / math.sqrt(in_features)
    w = jax.random.uniform(kw, (out_features, in_features), jnp.float32, -bound, bound)
    b = jax.random.uniform(kb, (out_features,), jnp.float32, -bound, bound)
    return w, b


def build_grouped_xnet_feature_params(key, n_concat, n_hidden):
    k1, k2 = jax.random.split(key)
    w1, b1 = _linear_params(k1, n_concat, n_hidden)   # torch layout (out, in)
    w2, b2 = _linear_params(k2, n_hidden, n_concat)
    if n_concat == n_hidden:
        # "GROUPED-FTR: using eye matrix as init" branch (biases keep default init).
        # TODO(synk): torch sets these as float64 np.eye tensors; f32 used here.
        w1 = jnp.eye(n_hidden, dtype=jnp.float32)
        w2 = jnp.eye(n_hidden, dtype=jnp.float32)

    a1 = w1.T                                   # (n_concat, n_hidden)
    a2 = w2.T                                   # (n_hidden, n_concat)
    # Exact fold of the two affine layers (no activation between them).
    w_fold = a1 @ a2                            # (n_concat, n_concat)
    b_fold = b1 @ a2 + b2                       # (n_concat,)

    # Pack as many feature groups as fit into the 128-lane vreg width.
    pack = max(1, 128 // n_concat)
    if pack > 1:
        # Block-diagonal weight for the lane-packed (rows, pack*n_concat) layout.
        w_packed = jnp.kron(jnp.eye(pack, dtype=jnp.float32), w_fold)
        b_packed = jnp.tile(b_fold, pack)
    else:
        w_packed, b_packed = w_fold, b_fold

    return {
        'n_concat': n_concat, 'n_hidden': n_hidden,
        'w1': w1, 'b1': b1, 'w2': w2, 'b2': b2,       # kept only for reference check
        'w_fold': w_fold, 'b_fold': b_fold,
        'pack_factor': pack, 'w_packed': w_packed, 'b_packed': b_packed,
    }


# ----------------------------------------------------------------------------
# Forward pass (mirrors GroupedXNetFeature.forward)
# ----------------------------------------------------------------------------
def grouped_xnet_feature_forward(params, x):
    # TODO(synk): optional self.debug shape printing is omitted (no-op on compute).
    k = params['n_concat']
    assert x.shape[-1] == k, (x.shape, k)
    lead = x.shape[:-1]
    m = math.prod(lead)
    out_dtype = x.dtype if jnp.issubdtype(x.dtype, jnp.floating) else jnp.float32

    # No wrapper-side astype: keep x in its native dtype (cast happens in-kernel).
    xf = x.reshape(m, k)

    g = params['pack_factor']
    width = g * k

    # Packed rows, padded up to a multiple of the (8-aligned) row tile so every
    # case runs the lane-dense path with full tiles.
    rows = -(-m // g)                       # ceil(m / g)
    tm = _pick_block_rows(rows)
    rows_pad = _round_up(rows, tm)
    m_pad = rows_pad * g
    if m_pad != m:
        xf = jnp.pad(xf, ((0, m_pad - m), (0, 0)))

    # (m_pad, k) and (rows_pad, g*k) alias the same row-major bytes -> free reshape.
    xp = xf.reshape(rows_pad, width)
    yp = _affine_pallas(xp, params['w_packed'], params['b_packed'], out_dtype, tm)
    y = yp.reshape(m_pad, k)
    if m_pad != m:
        y = y[:m]
    return y.reshape(*lead, k)


if __name__ == "__main__":
    n_concat, n_hidden = 8, 32
    key = jax.random.PRNGKey(0)
    key, kp, kx = jax.random.split(key, 3)
    params = build_grouped_xnet_feature_params(kp, n_concat, n_hidden)

    # x: stacked outputs of several down-scaled UNets on the last (feature) dim.
    x = jax.random.normal(kx, (2, 16, 16, n_concat), jnp.float32)

    out = grouped_xnet_feature_forward(params, x)
    out = jax.block_until_ready(out)
    assert out.shape == (2, 16, 16, n_concat), out.shape

    # Pure-JAX reference of the literal (unfolded) two-layer forward.
    xf = x.reshape(-1, n_concat)
    ref = (xf @ params['w1'].T + params['b1']) @ params['w2'].T + params['b2']
    ref = ref.reshape(x.shape[:-1] + (n_concat,))
    max_err = float(jnp.max(jnp.abs(out - ref)))
    assert jnp.allclose(out, ref, atol=1e-4, rtol=1e-4), max_err

    print("KERNEL_OK")
</pallas_src>

<mosaic_0001>
module attributes {stable_mosaic.version = 11 : i64} {
  func.func @_affine_kernel(%arg0: i32, %arg1: memref<32x128xf32, #tpu.memory_space<vmem>>, %arg2: memref<128x128xf32, #tpu.memory_space<vmem>>, %arg3: memref<1x128xf32, #tpu.memory_space<vmem>>, %arg4: memref<32x128xf32, #tpu.memory_space<vmem>>) attributes {dimension_semantics = [#tpu.dimension_semantics<parallel>], iteration_bounds = array<i64: 1>, scalar_prefetch = 0 : i64, scratch_operands = 0 : i64, tpu.core_type = #tpu.core_type<tc>, window_params = [{transform_indices = @transform_0, window_bounds = array<i64: 32, 128>}, {pipeline_mode = #tpu.pipeline_mode<synchronous>, transform_indices = @transform_1, window_bounds = array<i64: 128, 128>}, {pipeline_mode = #tpu.pipeline_mode<synchronous>, transform_indices = @transform_2, window_bounds = array<i64: 1, 128>}, {transform_indices = @transform_3, window_bounds = array<i64: 32, 128>}]} {
    %c0 = arith.constant 0 : index
    %c0_0 = arith.constant 0 : index
    %0 = vector.load %arg1[%c0, %c0_0] : memref<32x128xf32, #tpu.memory_space<vmem>>, vector<32x128xf32>
    %c0_1 = arith.constant 0 : index
    %c0_2 = arith.constant 0 : index
    %1 = vector.load %arg2[%c0_1, %c0_2] : memref<128x128xf32, #tpu.memory_space<vmem>>, vector<128x128xf32>
    %cst = arith.constant dense<0.000000e+00> : vector<32x128xf32>
    %2 = tpu.matmul %0, %1, %cst {dimension_numbers = #tpu.dot_dimension_numbers<[1], [0], [0], [1], [0, 0, 1, 1], [], []>} : vector<32x128xf32>, vector<128x128xf32>, vector<32x128xf32> -> vector<32x128xf32>
    %c0_3 = arith.constant 0 : index
    %c0_4 = arith.constant 0 : index
    %3 = vector.load %arg3[%c0_3, %c0_4] : memref<1x128xf32, #tpu.memory_space<vmem>>, vector<1x128xf32>
    %4 = vector.broadcast %3 : vector<1x128xf32> to vector<32x128xf32>
    %5 = arith.addf %2, %4 : vector<32x128xf32>
    %c0_5 = arith.constant 0 : index
    %c0_6 = arith.constant 0 : index
    %6 = vector.load %arg4[%c0_5, %c0_6] : memref<32x128xf32, #tpu.memory_space<vmem>>, vector<32x128xf32>
    tpu.vector_store %arg4[%c0_5, %c0_6], %5 {strides = array<i32>} : memref<32x128xf32, #tpu.memory_space<vmem>>, vector<32x128xf32>,
    return
  }
  func.func @transform_0(%arg0: i32) -> (i32, i32) {
    %c0_i32 = arith.constant 0 : i32
    %c0_i32_0 = arith.constant 0 : i32
    return %arg0, %c0_i32 : i32, i32
  }
  func.func @transform_1(%arg0: i32) -> (i32, i32) {
    %c0_i32 = arith.constant 0 : i32
    %c0_i32_0 = arith.constant 0 : i32
    %c0_i32_1 = arith.constant 0 : i32
    return %c0_i32, %c0_i32_0 : i32, i32
  }
  func.func @transform_2(%arg0: i32) -> (i32, i32) {
    %c0_i32 = arith.constant 0 : i32
    %c0_i32_0 = arith.constant 0 : i32
    %c0_i32_1 = arith.constant 0 : i32
    return %c0_i32, %c0_i32_0 : i32, i32
  }
  func.func @transform_3(%arg0: i32) -> (i32, i32) {
    %c0_i32 = arith.constant 0 : i32
    %c0_i32_0 = arith.constant 0 : i32
    return %arg0, %c0_i32 : i32, i32
  }
}

</mosaic_0001>

<llo_original>
// kernel: tpu_custom_call.1
$region0: #{tpu_custom_call.1}
  #allocation0 [shape = 'u32[]', space=smem, size = 0x4, offset = 0x4, fixed_abs, tag = 'smem constant byte address 0x4 - core index']
  #allocation1 [shape = 'u32[72,128]{1,0:T(1,128)}', space=vmem, size = 0x9000, scoped, tag = 'internal scratch']
  %s0 = inlined_call_operand.hbm [shape: f32[32,128], index: 0, kind: input, shape index: {}]
  %s1 = inlined_call_operand.hbm [shape: f32[128,128], index: 1, kind: input, shape index: {}]
  %s2 = inlined_call_operand.vmem [shape: f32[1,128], index: 2, kind: input, shape index: {}]
  %s3 = inlined_call_operand.hbm [shape: f32[32,128], index: 3, kind: output, shape index: {}]
  %s4 = sld [smem:[#allocation0]]
  $region30: #{tpu_custom_call.1} parent=0
    _
  %s6 = ssub.s32 1, %s4
  %s7 = scalar_select 0, %s6, %s4
  $region1: #{tpu_custom_call.1} parent=0
    #allocation2 [shape = 'u8[16384]{0}', space=vmem, size = 0x4000, scoped, tag = 'input window, operand 0, single buffered']
    #allocation3 [shape = 's32[1]{0}', space=sflag, size = 0x4, scoped, tag = 'scoped memory for tpu_custom_call.1']
    #allocation4 [shape = 's32[1]{0}', space=sflag, size = 0x4, scoped, tag = 'scoped memory for tpu_custom_call.1']
    #allocation5 [shape = 'u8[65536]{0}', space=vmem, size = 0x10000, scoped, tag = 'input window, operand 1, single buffered']
    #allocation6 [shape = 's32[1]{0}', space=sflag, size = 0x4, scoped, tag = 'scoped memory for tpu_custom_call.1']
    #allocation7 [shape = 'u8[16384]{0}', space=vmem, size = 0x4000, scoped, tag = 'output window, operand 0, single buffered']
    %8 = vsyncpa [#allocation3], 0
    %9 = vsyncpa [#allocation6], 0
    %10 = vsyncpa [#allocation4], 0
    // Predicated region
    $region2: #{tpu_custom_call.1} parent=1 // pred_check
      _
    $region3: #{tpu_custom_call.1} parent=1 // pred_check_branch
      %12 = sbr.rel (0) target = $region5
    $region4: #{tpu_custom_call.1} parent=1 // pred_region
      %14 = vsyncadd [#allocation3], 0
      %s15 = sshll.u32 %s0, 4
      %s16 = int_to_ptr.hbm [resolvable:$true] %s15
      %s17 = sshll.u32 [#allocation2], 4
      %s18 = int_to_ptr.vmem [resolvable:$true] %s17
      %23 = dma.hbm_to_vmem [thread:$0]  %s16, 512, %s18, [#allocation3], 128, 128, 8
    $region5: #{tpu_custom_call.1} parent=1 // pred_fallthru
      _
    // Predicated region
    $region6: #{tpu_custom_call.1} parent=1 // pred_check
      _
    $region7: #{tpu_custom_call.1} parent=1 // pred_check_branch
      %25 = sbr.rel (0) target = $region9
    $region8: #{tpu_custom_call.1} parent=1 // pred_region
      %27 = vsyncadd [#allocation6], 0
      %s28 = sshll.u32 %s1, 4
      %s29 = int_to_ptr.hbm [resolvable:$true] %s28
      %s30 = sshll.u32 [#allocation5], 4
      %s31 = int_to_ptr.vmem [resolvable:$true] %s30
      %36 = dma.hbm_to_vmem [thread:$0]  %s29, 2048, %s31, [#allocation6], 128, 128, 8
    $region9: #{tpu_custom_call.1} parent=1 // pred_fallthru
      _
    // Predicated region
    $region10: #{tpu_custom_call.1} parent=1 // pred_check
      _
    $region11: #{tpu_custom_call.1} parent=1 // pred_check_branch
      %38 = sbr.rel (0) target = $region13
    $region12: #{tpu_custom_call.1} parent=1 // pred_region
      _
    $region13: #{tpu_custom_call.1} parent=1 // pred_fallthru
      _
    // Predicated region
    $region14: #{tpu_custom_call.1} parent=1 // pred_check
      _
    $region15: #{tpu_custom_call.1} parent=1 // pred_check_branch
      %40 = sbr.rel (0) target = $region17
    $region16: #{tpu_custom_call.1} parent=1 // pred_region
      %42 = dma.done [#allocation3], 512
    $region17: #{tpu_custom_call.1} parent=1 // pred_fallthru
      _
    // Predicated region
    $region18: #{tpu_custom_call.1} parent=1 // pred_check
      _
    $region19: #{tpu_custom_call.1} parent=1 // pred_check_branch
      %44 = sbr.rel (0) target = $region21
    $region20: #{tpu_custom_call.1} parent=1 // pred_region
      %46 = dma.done [#allocation6], 2048
    $region21: #{tpu_custom_call.1} parent=1 // pred_fallthru
      _
    %v47 = vld [vmem:[#allocation2] sm:$0xff]
    %v48 = vld [vmem:[#allocation2 + $0x8] sm:$0xff]
    %v49 = vld [vmem:[#allocation2 + $0x10] sm:$0xff]
    %v50 = vld [vmem:[#allocation2 + $0x18] sm:$0xff]
    %v51 = vld [vmem:[#allocation5] sm:$0xff]
    %v52 = vld [vmem:[#allocation5 + $0x8] sm:$0xff]
    %v53 = vld [vmem:[#allocation5 + $0x10] sm:$0xff]
    %v54 = vld [vmem:[#allocation5 + $0x18] sm:$0xff]
    %v55 = vld [vmem:[#allocation5 + $0x20] sm:$0xff]
    %v56 = vld [vmem:[#allocation5 + $0x28] sm:$0xff]
    %v57 = vld [vmem:[#allocation5 + $0x30] sm:$0xff]
    %v58 = vld [vmem:[#allocation5 + $0x38] sm:$0xff]
    %v59 = vld [vmem:[#allocation5 + $0x40] sm:$0xff]
    %v60 = vld [vmem:[#allocation5 + $0x48] sm:$0xff]
    %v61 = vld [vmem:[#allocation5 + $0x50] sm:$0xff]
    %v62 = vld [vmem:[#allocation5 + $0x58] sm:$0xff]
    %v63 = vld [vmem:[#allocation5 + $0x60] sm:$0xff]
    %v64 = vld [vmem:[#allocation5 + $0x68] sm:$0xff]
    %v65 = vld [vmem:[#allocation5 + $0x70] sm:$0xff]
    %v66 = vld [vmem:[#allocation5 + $0x78] sm:$0xff]
    %v67 = vld [vmem:[%s2] sm:$0x1]
    %v69 = vperm.slane %v67, 0
    %71 = vmatpush.msra.mxu0 %v66
    %72 = vmatpush.msra.mxu0 %v65
    %73 = vmatpush.msra.mxu0 %v64
    %74 = vmatpush.msra.mxu0 %v63
    %75 = vmatpush.msra.mxu0 %v62
    %76 = vmatpush.msra.mxu0 %v61
    %77 = vmatpush.msra.mxu0 %v60
    %78 = vmatpush.msra.mxu0 %v59
    %79 = vmatpush.msra.mxu0 %v58
    %80 = vmatpush.msra.mxu0 %v57
    %81 = vmatpush.msra.mxu0 %v56
    %82 = vmatpush.msra.mxu0 %v55
    %83 = vmatpush.msra.mxu0 %v54
    %84 = vmatpush.msra.mxu0 %v53
    %85 = vmatpush.msra.mxu0 %v52
    %86 = vmatpush.msra.mxu0 %v51
    %87 = vmatmul.f32.gmra.mxu0 %v47
    %v88 = vpop.f32.mrf.mxu0
    %v89 = vadd.f32 %v69, %v88
    %90 = vmatmul.f32.gmra.mxu0 %v48
    %v91 = vpop.f32.mrf.mxu0
    %v92 = vadd.f32 %v69, %v91
    %93 = vmatmul.f32.gmra.mxu0 %v49
    %v94 = vpop.f32.mrf.mxu0
    %v95 = vadd.f32 %v69, %v94
    %96 = vmatmul.f32.gmra.mxu0 %v50
    %v97 = vpop.f32.mrf.mxu0
    %v98 = vadd.f32 %v69, %v97
    %99 = vdwg.mxu0
    %100 = vst [vmem:[#allocation7] sm:$0xff] %v89
    %101 = vst [vmem:[#allocation7 + $0x8] sm:$0xff] %v92
    %102 = vst [vmem:[#allocation7 + $0x10] sm:$0xff] %v95
    %103 = vst [vmem:[#allocation7 + $0x18] sm:$0xff] %v98
    // Predicated region
    $region22: #{tpu_custom_call.1} parent=1 // pred_check
      _
    $region23: #{tpu_custom_call.1} parent=1 // pred_check_branch
      %105 = sbr.rel (0) target = $region25
    $region24: #{tpu_custom_call.1} parent=1 // pred_region
      %107 = vsyncadd [#allocation4], 0
      %s108 = sshll.u32 [#allocation7], 4
      %s109 = int_to_ptr.vmem [resolvable:$true] %s108
      %s110 = sshll.u32 %s3, 4
      %s111 = int_to_ptr.hbm [resolvable:$true] %s110
      %116 = dma.vmem_to_hbm [thread:$0]  %s109, 512, %s111, [#allocation4], 128, 128, 8
    $region25: #{tpu_custom_call.1} parent=1 // pred_fallthru
      _
    // Predicated region
    $region26: #{tpu_custom_call.1} parent=1 // pred_check
      _
    $region27: #{tpu_custom_call.1} parent=1 // pred_check_branch
      %118 = sbr.rel (0) target = $region29
    $region28: #{tpu_custom_call.1} parent=1 // pred_region
      %120 = dma.done [#allocation4], 512
    $region29: #{tpu_custom_call.1} parent=1 // pred_fallthru
      _
    %121 = vsyncpa [#allocation3], 1
    %122 = vsyncpa [#allocation6], 1
    %123 = vsyncpa [#allocation4], 1

</llo_original>
